<compile_context>
chip_gen: v7x
topology: tpu7x:2x2x1
jax: 0.10.0
libtpu: 0.0.40
codegen_flags: <defaults>
</compile_context>

<pallas_src>
import jax
import jax.numpy as jnp
from jax import lax
from jax.experimental import pallas as pl
from jax.experimental.pallas import tpu as pltpu


def _round_up(x, m):
    return ((x + m - 1) // m) * m


def _mlp_kernel(u_ref, v_ref, emb_ref, w1t_ref, b1_ref, w2_ref, b2_ref, o_ref):
    # u_ref:   (TB, 1)      int32 user row ids in [0, NU)
    # v_ref:   (TB, 1)      int32 item row ids, pre-offset by NU (wrapper)
    # emb_ref: (NU+NI, 2E)  block-diag [[user_emb, 0], [0, item_emb]] (compute dtype, resident)
    # w1t_ref: (2E, H)      = W1.T (compute dtype, resident)
    # b1_ref:  (1, H)       first-layer bias  (f32)
    # w2_ref:  (1, H)       second-layer weight row (f32)
    # b2_ref:  (1, 1)       second-layer bias (f32)
    # o_ref:   (1, 1, TB)   lane-dense score row (f32)
    #
    # TODO(synk): nn.Dropout(0.1) is identity in eval mode; training-mode
    # stochastic masking (pltpu.prng_* + 1/(1-p) scaling) is not applied.
    tb = u_ref.shape[0]
    nt = emb_ref.shape[0]

    # Fused gather + concat as one MXU matmul: build a "two-hot" selector with
    # a 1 at column u_i (user block) and a 1 at column NU + v_i (item block).
    # Against the block-diagonal table this yields exactly
    # concat([user_emb[u_i], item_emb[v_i]], axis=1) per row.
    ids = lax.broadcasted_iota(jnp.int32, (tb, nt), 1)
    sel = jnp.logical_or(ids == u_ref[...], ids == v_ref[...])
    one = jnp.ones((), dtype=emb_ref.dtype)
    zero = jnp.zeros((), dtype=emb_ref.dtype)
    twohot = jnp.where(sel, one, zero)                       # (TB, NU+NI)

    x = jnp.dot(twohot, emb_ref[...],
                preferred_element_type=jnp.float32).astype(w1t_ref.dtype)  # (TB, 2E)

    # Layer 1: single K=2E matmul, f32 accumulation, f32 bias + ReLU (VPU).
    h = jnp.dot(x, w1t_ref[...], preferred_element_type=jnp.float32) + b1_ref[...]
    h = jnp.maximum(h, 0.0)                                  # (TB, H) f32

    # Layer 2: (1, H) . (TB, H)^T -> (1, TB), lane-dense (batch on lanes) so
    # the store is an unmasked vst instead of a (TB, 1) masked-store column.
    scores = lax.dot_general(
        w2_ref[...], h,
        dimension_numbers=(((1,), (1,)), ((), ())),
        preferred_element_type=jnp.float32,
    ) + b2_ref[...]
    o_ref[...] = scores[None].astype(o_ref.dtype)            # (1, 1, TB)


def prepare_params(params, compute_dtype=jnp.float32):
    """One-time re-layout of torch-style parameters into kernel layout.

    Builds the block-diagonal combined embedding table and W1.T once (hoisted
    out of the per-call path).  Biases and W2 stay f32; the tables / W1 take
    `compute_dtype` — bf16 halves HBM/VMEM traffic and is valid on v5e, v6e
    and v7x (MXU bf16 inputs with f32 accumulation; VPU math stays f32).
    """
    user_emb = params["user_emb"]
    item_emb = params["item_emb"]
    nu, e = user_emb.shape
    ni = item_emb.shape[0]
    h = params["w1"].shape[0]

    emb_cat = jnp.zeros((nu + ni, 2 * e), compute_dtype)
    emb_cat = emb_cat.at[:nu, :e].set(user_emb.astype(compute_dtype))
    emb_cat = emb_cat.at[nu:, e:].set(item_emb.astype(compute_dtype))

    return {
        "emb_cat": emb_cat,                                   # (NU+NI, 2E)
        "num_users": nu,
        "w1t": params["w1"].T.astype(compute_dtype),          # (2E, H)
        "b1": params["b1"].reshape(1, h).astype(jnp.float32),
        "w2": params["w2"].reshape(1, h).astype(jnp.float32),
        "b2": params["b2"].reshape(1, 1).astype(jnp.float32),
    }


def nn_collab_filtering_forward(u_idx, v_idx, prepared, *, block_b=2048):
    """Fully fused forward: in-kernel gather + 2-layer MLP over a parallel batch grid."""
    emb_cat = prepared["emb_cat"]
    w1t = prepared["w1t"]
    b1, w2, b2 = prepared["b1"], prepared["w2"], prepared["b2"]
    nu = prepared["num_users"]

    nt, two_e = emb_cat.shape
    hdim = w1t.shape[1]
    b = u_idx.shape[0]

    # TODO(synk): for embedding tables too large for VMEM residency, keep them
    # in memory_space=pl.ANY and gather rows with index-driven async DMAs
    # (scalar-prefetched indices) instead of the resident two-hot matmul.

    u = u_idx.astype(jnp.int32)
    v = v_idx.astype(jnp.int32) + nu           # offset into the item block of emb_cat

    # Batch tile: large (block_b rows, multiple of 128 -> lane-dense output and
    # full sublane packing for any compute dtype), but capped so the parallel
    # batch axis keeps >= ~4 tiles for megacore sharding on v7x when B is big.
    tile = 128
    desired = _round_up(max(block_b, tile), tile)
    cap = _round_up(-(-b // 4), tile)
    tb = min(desired, cap)
    b_pad = _round_up(b, tb)
    if b_pad != b:
        # Pad only the cheap int32 index vectors (never (B, E) activations).
        u = jnp.pad(u, (0, b_pad - b))
        v = jnp.pad(v, (0, b_pad - b))
    grid_b = b_pad // tb

    u2 = u.reshape(b_pad, 1)
    v2 = v.reshape(b_pad, 1)

    out = pl.pallas_call(
        _mlp_kernel,
        out_shape=jax.ShapeDtypeStruct((grid_b, 1, tb), jnp.float32),
        grid_spec=pltpu.PrefetchScalarGridSpec(
            num_scalar_prefetch=0,
            grid=(grid_b,),
            in_specs=[
                pl.BlockSpec((tb, 1), lambda i: (i, 0)),        # u indices (pipelined)
                pl.BlockSpec((tb, 1), lambda i: (i, 0)),        # v indices (pipelined)
                pl.BlockSpec((nt, two_e), lambda i: (0, 0)),    # emb_cat (resident)
                pl.BlockSpec((two_e, hdim), lambda i: (0, 0)),  # W1.T     (resident)
                pl.BlockSpec((1, hdim), lambda i: (0, 0)),      # b1
                pl.BlockSpec((1, hdim), lambda i: (0, 0)),      # w2 row
                pl.BlockSpec((1, 1), lambda i: (0, 0)),         # b2
            ],
            out_specs=pl.BlockSpec((1, 1, tb), lambda i: (i, 0, 0)),
        ),
        compiler_params=pltpu.CompilerParams(
            dimension_semantics=("parallel",),
            vmem_limit_bytes=32 << 20,
        ),
    )(u2, v2, emb_cat, w1t, b1, w2, b2)

    return out.reshape(b_pad)[:b].reshape(b, 1)


def init_params(key, num_users, num_items, emb_size, n_hidden):
    """Deterministic init matching the module's __init__:
    embeddings & linear weights ~ U(0, 0.05); biases use torch Linear default
    U(-1/sqrt(fan_in), 1/sqrt(fan_in))."""
    k = jax.random.split(key, 6)
    params = {
        "user_emb": jax.random.uniform(k[0], (num_users, emb_size), jnp.float32, 0.0, 0.05),
        "item_emb": jax.random.uniform(k[1], (num_items, emb_size), jnp.float32, 0.0, 0.05),
        "w1": jax.random.uniform(k[2], (n_hidden, 2 * emb_size), jnp.float32, 0.0, 0.05),
        "w2": jax.random.uniform(k[3], (1, n_hidden), jnp.float32, 0.0, 0.05),
    }
    bound1 = 1.0 / jnp.sqrt(2.0 * emb_size)
    bound2 = 1.0 / jnp.sqrt(float(n_hidden))
    params["b1"] = jax.random.uniform(k[4], (n_hidden,), jnp.float32, -bound1, bound1)
    params["b2"] = jax.random.uniform(k[5], (1,), jnp.float32, -bound2, bound2)
    return params


def reference_forward(u_idx, v_idx, params):
    """Plain-JAX reference for correctness check."""
    U = params["user_emb"][u_idx]
    V = params["item_emb"][v_idx]
    x = jnp.concatenate([U, V], axis=1)
    h = jnp.maximum(x @ params["w1"].T + params["b1"], 0.0)
    return h @ params["w2"].T + params["b2"]


if __name__ == "__main__":
    # Small shapes consistent with the module's forward.
    num_users, num_items = 16, 8
    emb_size, n_hidden = 32, 32
    batch = 8

    key = jax.random.PRNGKey(0)
    pkey, ukey, vkey = jax.random.split(key, 3)
    params = init_params(pkey, num_users, num_items, emb_size, n_hidden)

    u_idx = jax.random.randint(ukey, (batch,), 0, num_users, dtype=jnp.int32)
    v_idx = jax.random.randint(vkey, (batch,), 0, num_items, dtype=jnp.int32)

    ref = reference_forward(u_idx, v_idx, params)

    # f32 compute path: correctness check against the plain-JAX reference.
    prepared_f32 = prepare_params(params, jnp.float32)
    out_f32 = jax.block_until_ready(
        nn_collab_filtering_forward(u_idx, v_idx, prepared_f32))
    assert out_f32.shape == (batch, 1), out_f32.shape
    assert jnp.allclose(out_f32, ref, atol=1e-4, rtol=1e-4), (out_f32, ref)

    # bf16 compute path (valid on v5e/v6e/v7x): bf16 tables/W1 on the MXU with
    # f32 accumulation; bias add, ReLU and output remain f32.
    prepared_bf16 = prepare_params(params, jnp.bfloat16)
    out_bf16 = jax.block_until_ready(
        nn_collab_filtering_forward(u_idx, v_idx, prepared_bf16))
    assert out_bf16.shape == (batch, 1), out_bf16.shape
    assert jnp.allclose(out_bf16, ref, atol=1e-2, rtol=1e-2), (out_bf16, ref)

    print("KERNEL_OK")
</pallas_src>

<mosaic_0001>
module attributes {stable_mosaic.version = 11 : i64} {
  func.func @_mlp_kernel(%arg0: i32, %arg1: memref<128x1xi32, #tpu.memory_space<vmem>>, %arg2: memref<128x1xi32, #tpu.memory_space<vmem>>, %arg3: memref<24x64xf32, #tpu.memory_space<vmem>>, %arg4: memref<64x32xf32, #tpu.memory_space<vmem>>, %arg5: memref<1x32xf32, #tpu.memory_space<vmem>>, %arg6: memref<1x32xf32, #tpu.memory_space<vmem>>, %arg7: memref<1x1xf32, #tpu.memory_space<vmem>>, %arg8: memref<1x1x128xf32, #tpu.memory_space<vmem>>) attributes {dimension_semantics = [#tpu.dimension_semantics<parallel>], iteration_bounds = array<i64: 1>, scalar_prefetch = 0 : i64, scratch_operands = 0 : i64, tpu.core_type = #tpu.core_type<tc>, window_params = [{transform_indices = @transform_0, window_bounds = array<i64: 128, 1>}, {transform_indices = @transform_1, window_bounds = array<i64: 128, 1>}, {pipeline_mode = #tpu.pipeline_mode<synchronous>, transform_indices = @transform_2, window_bounds = array<i64: 24, 64>}, {pipeline_mode = #tpu.pipeline_mode<synchronous>, transform_indices = @transform_3, window_bounds = array<i64: 64, 32>}, {pipeline_mode = #tpu.pipeline_mode<synchronous>, transform_indices = @transform_4, window_bounds = array<i64: 1, 32>}, {pipeline_mode = #tpu.pipeline_mode<synchronous>, transform_indices = @transform_5, window_bounds = array<i64: 1, 32>}, {pipeline_mode = #tpu.pipeline_mode<synchronous>, transform_indices = @transform_6, window_bounds = array<i64: 1, 1>}, {transform_indices = @transform_7, window_bounds = array<i64: 1, 1, 128>}]} {
    %0 = tpu.iota {dimensions = array<i32: 1>} : vector<128x24xi32>
    %c0 = arith.constant 0 : index
    %c0_0 = arith.constant 0 : index
    %1 = vector.load %arg1[%c0, %c0_0] : memref<128x1xi32, #tpu.memory_space<vmem>>, vector<128x1xi32>
    %2 = vector.broadcast %1 : vector<128x1xi32> to vector<128x24xi32>
    %3 = arith.cmpi eq, %0, %2 : vector<128x24xi32>
    %c0_1 = arith.constant 0 : index
    %c0_2 = arith.constant 0 : index
    %4 = vector.load %arg2[%c0_1, %c0_2] : memref<128x1xi32, #tpu.memory_space<vmem>>, vector<128x1xi32>
    %5 = vector.broadcast %4 : vector<128x1xi32> to vector<128x24xi32>
    %6 = arith.cmpi eq, %0, %5 : vector<128x24xi32>
    %7 = arith.ori %3, %6 : vector<128x24xi1>
    %cst = arith.constant 1.000000e+00 : f32
    %cst_3 = arith.constant 0.000000e+00 : f32
    %8 = vector.broadcast %cst : f32 to vector<128x24xf32>
    %9 = vector.broadcast %cst_3 : f32 to vector<128x24xf32>
    %10 = arith.select %7, %8, %9 : vector<128x24xi1>, vector<128x24xf32>
    %c0_4 = arith.constant 0 : index
    %c0_5 = arith.constant 0 : index
    %11 = vector.load %arg3[%c0_4, %c0_5] : memref<24x64xf32, #tpu.memory_space<vmem>>, vector<24x64xf32>
    %cst_6 = arith.constant dense<0.000000e+00> : vector<128x64xf32>
    %12 = tpu.matmul %10, %11, %cst_6 {dimension_numbers = #tpu.dot_dimension_numbers<[1], [0], [0], [1], [0, 0, 1, 1], [], []>} : vector<128x24xf32>, vector<24x64xf32>, vector<128x64xf32> -> vector<128x64xf32>
    %c0_7 = arith.constant 0 : index
    %c0_8 = arith.constant 0 : index
    %13 = vector.load %arg4[%c0_7, %c0_8] : memref<64x32xf32, #tpu.memory_space<vmem>>, vector<64x32xf32>
    %cst_9 = arith.constant dense<0.000000e+00> : vector<128x32xf32>
    %14 = tpu.matmul %12, %13, %cst_9 {dimension_numbers = #tpu.dot_dimension_numbers<[1], [0], [0], [1], [0, 0, 1, 1], [], []>} : vector<128x64xf32>, vector<64x32xf32>, vector<128x32xf32> -> vector<128x32xf32>
    %c0_10 = arith.constant 0 : index
    %c0_11 = arith.constant 0 : index
    %15 = vector.load %arg5[%c0_10, %c0_11] : memref<1x32xf32, #tpu.memory_space<vmem>>, vector<1x32xf32>
    %16 = vector.broadcast %15 : vector<1x32xf32> to vector<128x32xf32>
    %17 = arith.addf %14, %16 : vector<128x32xf32>
    %cst_12 = arith.constant 0.000000e+00 : f32
    %18 = vector.broadcast %cst_12 : f32 to vector<128x32xf32>
    %19 = arith.maximumf %17, %18 : vector<128x32xf32>
    %c0_13 = arith.constant 0 : index
    %c0_14 = arith.constant 0 : index
    %20 = vector.load %arg6[%c0_13, %c0_14] : memref<1x32xf32, #tpu.memory_space<vmem>>, vector<1x32xf32>
    %cst_15 = arith.constant dense<0.000000e+00> : vector<1x128xf32>
    %21 = tpu.matmul %20, %19, %cst_15 {dimension_numbers = #tpu.dot_dimension_numbers<[1], [1], [0], [0], [0, 0, 1, 0], [], []>} : vector<1x32xf32>, vector<128x32xf32>, vector<1x128xf32> -> vector<1x128xf32>
    %c0_16 = arith.constant 0 : index
    %c0_17 = arith.constant 0 : index
    %22 = vector.load %arg7[%c0_16, %c0_17] : memref<1x1xf32, #tpu.memory_space<vmem>>, vector<1x1xf32>
    %23 = vector.broadcast %22 : vector<1x1xf32> to vector<1x128xf32>
    %24 = arith.addf %21, %23 : vector<1x128xf32>
    %25 = vector.shape_cast %24 : vector<1x128xf32> to vector<1x1x128xf32>
    %c0_18 = arith.constant 0 : index
    %c0_19 = arith.constant 0 : index
    %c0_20 = arith.constant 0 : index
    %26 = vector.load %arg8[%c0_18, %c0_19, %c0_20] : memref<1x1x128xf32, #tpu.memory_space<vmem>>, vector<1x1x128xf32>
    tpu.vector_store %arg8[%c0_18, %c0_19, %c0_20], %25 {strides = array<i32>} : memref<1x1x128xf32, #tpu.memory_space<vmem>>, vector<1x1x128xf32>,
    return
  }
  func.func @transform_0(%arg0: i32) -> (i32, i32) {
    %c0_i32 = arith.constant 0 : i32
    %c0_i32_0 = arith.constant 0 : i32
    return %arg0, %c0_i32 : i32, i32
  }
  func.func @transform_1(%arg0: i32) -> (i32, i32) {
    %c0_i32 = arith.constant 0 : i32
    %c0_i32_0 = arith.constant 0 : i32
    return %arg0, %c0_i32 : i32, i32
  }
  func.func @transform_2(%arg0: i32) -> (i32, i32) {
    %c0_i32 = arith.constant 0 : i32
    %c0_i32_0 = arith.constant 0 : i32
    %c0_i32_1 = arith.constant 0 : i32
    return %c0_i32, %c0_i32_0 : i32, i32
  }
  func.func @transform_3(%arg0: i32) -> (i32, i32) {
    %c0_i32 = arith.constant 0 : i32
    %c0_i32_0 = arith.constant 0 : i32
    %c0_i32_1 = arith.constant 0 : i32
    return %c0_i32, %c0_i32_0 : i32, i32
  }
  func.func @transform_4(%arg0: i32) -> (i32, i32) {
    %c0_i32 = arith.constant 0 : i32
    %c0_i32_0 = arith.constant 0 : i32
    %c0_i32_1 = arith.constant 0 : i32
    return %c0_i32, %c0_i32_0 : i32, i32
  }
  func.func @transform_5(%arg0: i32) -> (i32, i32) {
    %c0_i32 = arith.constant 0 : i32
    %c0_i32_0 = arith.constant 0 : i32
    %c0_i32_1 = arith.constant 0 : i32
    return %c0_i32, %c0_i32_0 : i32, i32
  }
  func.func @transform_6(%arg0: i32) -> (i32, i32) {
    %c0_i32 = arith.constant 0 : i32
    %c0_i32_0 = arith.constant 0 : i32
    %c0_i32_1 = arith.constant 0 : i32
    return %c0_i32, %c0_i32_0 : i32, i32
  }
  func.func @transform_7(%arg0: i32) -> (i32, i32, i32) {
    %c0_i32 = arith.constant 0 : i32
    %c0_i32_0 = arith.constant 0 : i32
    %c0_i32_1 = arith.constant 0 : i32
    return %arg0, %c0_i32, %c0_i32_0 : i32, i32, i32
  }
}

</mosaic_0001>

<llo_original>
// kernel: tpu_custom_call.1
$region0: #{tpu_custom_call.1}
  #allocation0 [shape = 'u32[]', space=smem, size = 0x4, offset = 0x4, fixed_abs, tag = 'smem constant byte address 0x4 - core index']
  #allocation1 [shape = 'u32[144,128]{1,0:T(1,128)}', space=vmem, size = 0x12000, scoped, tag = 'internal scratch']
  #allocation2 [shape = 'f32[1,1]{1,0:T(1,128)S(1)}', space=vmem, size = 0x200, scoped, tag = 'scoped memory for tpu_custom_call.1']
  %s0 = inlined_call_operand.vmem [shape: s32[128,1], index: 0, kind: input, shape index: {}]
  %s1 = inlined_call_operand.vmem [shape: s32[128,1], index: 1, kind: input, shape index: {}]
  %s2 = inlined_call_operand.vmem [shape: f32[24,64], index: 2, kind: input, shape index: {}]
  %s3 = inlined_call_operand.vmem [shape: f32[64,32], index: 3, kind: input, shape index: {}]
  %s4 = inlined_call_operand.vmem [shape: f32[1,32], index: 4, kind: input, shape index: {}]
  %s5 = inlined_call_operand.vmem [shape: f32[1,32], index: 5, kind: input, shape index: {}]
  %s6 = inlined_call_operand.<no memory space> [shape: f32[1,1], index: 6, kind: input, shape index: {}]
  %s7 = inlined_call_operand.hbm [shape: f32[1,1,128], index: 7, kind: output, shape index: {}]
  %s8 = sld [smem:[#allocation0]]
  $region38: #{tpu_custom_call.1} parent=0
    _
  %s10 = ssub.s32 1, %s8
  %s11 = scalar_select 0, %s10, %s8
  %v12 = vstv %s6
  %13 = vst [vmem:[#allocation2] sm:$0x1] %v12
  $region1: #{tpu_custom_call.1} parent=0
    #allocation3 [shape = 'u8[512]{0}', space=vmem, size = 0x400, scoped, tag = 'output window, operand 0, single buffered']
    #allocation4 [shape = 's32[1]{0}', space=sflag, size = 0x4, scoped, tag = 'scoped memory for tpu_custom_call.1']
    %14 = vsyncpa [#allocation4], 0
    // Predicated region
    $region2: #{tpu_custom_call.1} parent=1 // pred_check
      _
    $region3: #{tpu_custom_call.1} parent=1 // pred_check_branch
      %16 = sbr.rel (0) target = $region5
    $region4: #{tpu_custom_call.1} parent=1 // pred_region
      _
    $region5: #{tpu_custom_call.1} parent=1 // pred_fallthru
      _
    // Predicated region
    $region6: #{tpu_custom_call.1} parent=1 // pred_check
      _
    $region7: #{tpu_custom_call.1} parent=1 // pred_check_branch
      %18 = sbr.rel (0) target = $region9
    $region8: #{tpu_custom_call.1} parent=1 // pred_region
      _
    $region9: #{tpu_custom_call.1} parent=1 // pred_fallthru
      _
    // Predicated region
    $region10: #{tpu_custom_call.1} parent=1 // pred_check
      _
    $region11: #{tpu_custom_call.1} parent=1 // pred_check_branch
      %20 = sbr.rel (0) target = $region13
    $region12: #{tpu_custom_call.1} parent=1 // pred_region
      _
    $region13: #{tpu_custom_call.1} parent=1 // pred_fallthru
      _
    // Predicated region
    $region14: #{tpu_custom_call.1} parent=1 // pred_check
      _
    $region15: #{tpu_custom_call.1} parent=1 // pred_check_branch
      %22 = sbr.rel (0) target = $region17
    $region16: #{tpu_custom_call.1} parent=1 // pred_region
      _
    $region17: #{tpu_custom_call.1} parent=1 // pred_fallthru
      _
    // Predicated region
    $region18: #{tpu_custom_call.1} parent=1 // pred_check
      _
    $region19: #{tpu_custom_call.1} parent=1 // pred_check_branch
      %24 = sbr.rel (0) target = $region21
    $region20: #{tpu_custom_call.1} parent=1 // pred_region
      _
    $region21: #{tpu_custom_call.1} parent=1 // pred_fallthru
      _
    // Predicated region
    $region22: #{tpu_custom_call.1} parent=1 // pred_check
      _
    $region23: #{tpu_custom_call.1} parent=1 // pred_check_branch
      %26 = sbr.rel (0) target = $region25
    $region24: #{tpu_custom_call.1} parent=1 // pred_region
      _
    $region25: #{tpu_custom_call.1} parent=1 // pred_fallthru
      _
    // Predicated region
    $region26: #{tpu_custom_call.1} parent=1 // pred_check
      _
    $region27: #{tpu_custom_call.1} parent=1 // pred_check_branch
      %28 = sbr.rel (0) target = $region29
    $region28: #{tpu_custom_call.1} parent=1 // pred_region
      _
    $region29: #{tpu_custom_call.1} parent=1 // pred_fallthru
      _
    %v29 = vlaneseq
    %v30 = vand.u32 %v29, 127
    %v31 = vld [vmem:[%s0] sm:$0xff]
    %v32 = vld [vmem:[%s0 + $0x8] sm:$0xff]
    %v33 = vld [vmem:[%s0 + $0x10] sm:$0xff]
    %v34 = vld [vmem:[%s0 + $0x18] sm:$0xff]
    %v35 = vld [vmem:[%s0 + $0x20] sm:$0xff]
    %v36 = vld [vmem:[%s0 + $0x28] sm:$0xff]
    %v37 = vld [vmem:[%s0 + $0x30] sm:$0xff]
    %v38 = vld [vmem:[%s0 + $0x38] sm:$0xff]
    %v39 = vld [vmem:[%s0 + $0x40] sm:$0xff]
    %v40 = vld [vmem:[%s0 + $0x48] sm:$0xff]
    %v41 = vld [vmem:[%s0 + $0x50] sm:$0xff]
    %v42 = vld [vmem:[%s0 + $0x58] sm:$0xff]
    %v43 = vld [vmem:[%s0 + $0x60] sm:$0xff]
    %v44 = vld [vmem:[%s0 + $0x68] sm:$0xff]
    %v45 = vld [vmem:[%s0 + $0x70] sm:$0xff]
    %v46 = vld [vmem:[%s0 + $0x78] sm:$0xff]
    %47 = vset.pattern.permute.xlu0 0
    %48 = vperm.xlu0 %47, %v31
    %v49 = vpop.permute.xlu0 %48
    %50 = vset.pattern.permute.xlu0 0
    %51 = vperm.xlu0 %50, %v32
    %v52 = vpop.permute.xlu0 %51
    %53 = vset.pattern.permute.xlu0 0
    %54 = vperm.xlu0 %53, %v33
    %v55 = vpop.permute.xlu0 %54
    %56 = vset.pattern.permute.xlu0 0
    %57 = vperm.xlu0 %56, %v34
    %v58 = vpop.permute.xlu0 %57
    %59 = vset.pattern.permute.xlu0 0
    %60 = vperm.xlu0 %59, %v35
    %v61 = vpop.permute.xlu0 %60
    %62 = vset.pattern.permute.xlu0 0
    %63 = vperm.xlu0 %62, %v36
    %v64 = vpop.permute.xlu0 %63
    %65 = vset.pattern.permute.xlu0 0
    %66 = vperm.xlu0 %65, %v37
    %v67 = vpop.permute.xlu0 %66
    %68 = vset.pattern.permute.xlu0 0
    %69 = vperm.xlu0 %68, %v38
    %v70 = vpop.permute.xlu0 %69
    %71 = vset.pattern.permute.xlu0 0
    %72 = vperm.xlu0 %71, %v39
    %v73 = vpop.permute.xlu0 %72
    %74 = vset.pattern.permute.xlu0 0
    %75 = vperm.xlu0 %74, %v40
    %v76 = vpop.permute.xlu0 %75
    %77 = vset.pattern.permute.xlu0 0
    %78 = vperm.xlu0 %77, %v41
    %v79 = vpop.permute.xlu0 %78
    %80 = vset.pattern.permute.xlu0 0
    %81 = vperm.xlu0 %80, %v42
    %v82 = vpop.permute.xlu0 %81
    %83 = vset.pattern.permute.xlu0 0
    %84 = vperm.xlu0 %83, %v43
    %v85 = vpop.permute.xlu0 %84
    %86 = vset.pattern.permute.xlu0 0
    %87 = vperm.xlu0 %86, %v44
    %v88 = vpop.permute.xlu0 %87
    %89 = vset.pattern.permute.xlu0 0
    %90 = vperm.xlu0 %89, %v45
    %v91 = vpop.permute.xlu0 %90
    %92 = vset.pattern.permute.xlu0 0
    %93 = vperm.xlu0 %92, %v46
    %v94 = vpop.permute.xlu0 %93
    %vm95 = vcmp.eq.s32.totalorder %v30, %v49
    %vm96 = vcmp.eq.s32.totalorder %v30, %v52
    %vm97 = vcmp.eq.s32.totalorder %v30, %v55
    %vm98 = vcmp.eq.s32.totalorder %v30, %v58
    %vm99 = vcmp.eq.s32.totalorder %v30, %v61
    %vm100 = vcmp.eq.s32.totalorder %v30, %v64
    %vm101 = vcmp.eq.s32.totalorder %v30, %v67
    %vm102 = vcmp.eq.s32.totalorder %v30, %v70
    %vm103 = vcmp.eq.s32.totalorder %v30, %v73
    %vm104 = vcmp.eq.s32.totalorder %v30, %v76
    %vm105 = vcmp.eq.s32.totalorder %v30, %v79
    %vm106 = vcmp.eq.s32.totalorder %v30, %v82
    %vm107 = vcmp.eq.s32.totalorder %v30, %v85
    %vm108 = vcmp.eq.s32.totalorder %v30, %v88
    %vm109 = vcmp.eq.s32.totalorder %v30, %v91
    %vm110 = vcmp.eq.s32.totalorder %v30, %v94
    %v111 = vld [vmem:[%s1] sm:$0xff]
    %v112 = vld [vmem:[%s1 + $0x8] sm:$0xff]
    %v113 = vld [vmem:[%s1 + $0x10] sm:$0xff]
    %v114 = vld [vmem:[%s1 + $0x18] sm:$0xff]
    %v115 = vld [vmem:[%s1 + $0x20] sm:$0xff]
    %v116 = vld [vmem:[%s1 + $0x28] sm:$0xff]
    %v117 = vld [vmem:[%s1 + $0x30] sm:$0xff]
    %v118 = vld [vmem:[%s1 + $0x38] sm:$0xff]
    %v119 = vld [vmem:[%s1 + $0x40] sm:$0xff]
    %v120 = vld [vmem:[%s1 + $0x48] sm:$0xff]
    %v121 = vld [vmem:[%s1 + $0x50] sm:$0xff]
    %v122 = vld [vmem:[%s1 + $0x58] sm:$0xff]
    %v123 = vld [vmem:[%s1 + $0x60] sm:$0xff]
    %v124 = vld [vmem:[%s1 + $0x68] sm:$0xff]
    %v125 = vld [vmem:[%s1 + $0x70] sm:$0xff]
    %v126 = vld [vmem:[%s1 + $0x78] sm:$0xff]
    %127 = vset.pattern.permute.xlu0 0
    %128 = vperm.xlu0 %127, %v111
    %v129 = vpop.permute.xlu0 %128
    %130 = vset.pattern.permute.xlu0 0
    %131 = vperm.xlu0 %130, %v112
    %v132 = vpop.permute.xlu0 %131
    %133 = vset.pattern.permute.xlu0 0
    %134 = vperm.xlu0 %133, %v113
    %v135 = vpop.permute.xlu0 %134
    %136 = vset.pattern.permute.xlu0 0
    %137 = vperm.xlu0 %136, %v114
    %v138 = vpop.permute.xlu0 %137
    %139 = vset.pattern.permute.xlu0 0
    %140 = vperm.xlu0 %139, %v115
    %v141 = vpop.permute.xlu0 %140
    %142 = vset.pattern.permute.xlu0 0
    %143 = vperm.xlu0 %142, %v116
    %v144 = vpop.permute.xlu0 %143
    %145 = vset.pattern.permute.xlu0 0
    %146 = vperm.xlu0 %145, %v117
    %v147 = vpop.permute.xlu0 %146
    %148 = vset.pattern.permute.xlu0 0
    %149 = vperm.xlu0 %148, %v118
    %v150 = vpop.permute.xlu0 %149
    %151 = vset.pattern.permute.xlu0 0
    %152 = vperm.xlu0 %151, %v119
    %v153 = vpop.permute.xlu0 %152
    %154 = vset.pattern.permute.xlu0 0
    %155 = vperm.xlu0 %154, %v120
    %v156 = vpop.permute.xlu0 %155
    %157 = vset.pattern.permute.xlu0 0
    %158 = vperm.xlu0 %157, %v121
    %v159 = vpop.permute.xlu0 %158
    %160 = vset.pattern.permute.xlu0 0
    %161 = vperm.xlu0 %160, %v122
    %v162 = vpop.permute.xlu0 %161
    %163 = vset.pattern.permute.xlu0 0
    %164 = vperm.xlu0 %163, %v123
    %v165 = vpop.permute.xlu0 %164
    %166 = vset.pattern.permute.xlu0 0
    %167 = vperm.xlu0 %166, %v124
    %v168 = vpop.permute.xlu0 %167
    %169 = vset.pattern.permute.xlu0 0
    %170 = vperm.xlu0 %169, %v125
    %v171 = vpop.permute.xlu0 %170
    %172 = vset.pattern.permute.xlu0 0
    %173 = vperm.xlu0 %172, %v126
    %v174 = vpop.permute.xlu0 %173
    %vm175 = vcmp.eq.s32.totalorder %v30, %v129
    %vm176 = vcmp.eq.s32.totalorder %v30, %v132
    %vm177 = vcmp.eq.s32.totalorder %v30, %v135
    %vm178 = vcmp.eq.s32.totalorder %v30, %v138
    %vm179 = vcmp.eq.s32.totalorder %v30, %v141
    %vm180 = vcmp.eq.s32.totalorder %v30, %v144
    %vm181 = vcmp.eq.s32.totalorder %v30, %v147
    %vm182 = vcmp.eq.s32.totalorder %v30, %v150
    %vm183 = vcmp.eq.s32.totalorder %v30, %v153
    %vm184 = vcmp.eq.s32.totalorder %v30, %v156
    %vm185 = vcmp.eq.s32.totalorder %v30, %v159
    %vm186 = vcmp.eq.s32.totalorder %v30, %v162
    %vm187 = vcmp.eq.s32.totalorder %v30, %v165
    %vm188 = vcmp.eq.s32.totalorder %v30, %v168
    %vm189 = vcmp.eq.s32.totalorder %v30, %v171
    %vm190 = vcmp.eq.s32.totalorder %v30, %v174
    %vm191 = vmor %vm95, %vm175
    %vm192 = vmor %vm96, %vm176
    %vm193 = vmor %vm97, %vm177
    %vm194 = vmor %vm98, %vm178
    %vm195 = vmor %vm99, %vm179
    %vm196 = vmor %vm100, %vm180
    %vm197 = vmor %vm101, %vm181
    %vm198 = vmor %vm102, %vm182
    %vm199 = vmor %vm103, %vm183
    %vm200 = vmor %vm104, %vm184
    %vm201 = vmor %vm105, %vm185
    %vm202 = vmor %vm106, %vm186
    %vm203 = vmor %vm107, %vm187
    %vm204 = vmor %vm108, %vm188
    %vm205 = vmor %vm109, %vm189
    %vm206 = vmor %vm110, %vm190
    %v207 = vsel %vm191, 1.0, 0.0
    %v208 = vsel %vm192, 1.0, 0.0
    %v209 = vsel %vm193, 1.0, 0.0
    %v210 = vsel %vm194, 1.0, 0.0
    %v211 = vsel %vm195, 1.0, 0.0
    %v212 = vsel %vm196, 1.0, 0.0
    %v213 = vsel %vm197, 1.0, 0.0
    %v214 = vsel %vm198, 1.0, 0.0
    %v215 = vsel %vm199, 1.0, 0.0
    %v216 = vsel %vm200, 1.0, 0.0
    %v217 = vsel %vm201, 1.0, 0.0
    %v218 = vsel %vm202, 1.0, 0.0
    %v219 = vsel %vm203, 1.0, 0.0
    %v220 = vsel %vm204, 1.0, 0.0
    %v221 = vsel %vm205, 1.0, 0.0
    %v222 = vsel %vm206, 1.0, 0.0
    %v223 = vld [vmem:[%s2] sm:$0xff]
    %v224 = vld [vmem:[%s2 + $0x8] sm:$0xff]
    %v225 = vld [vmem:[%s2 + $0x10] sm:$0xff]
    %vm226 = vcmask 195584
    %v228 = vsel %vm226, %v207, 0
    %v231 = vsel %vm226, %v208, 0
    %v234 = vsel %vm226, %v209, 0
    %v237 = vsel %vm226, %v210, 0
    %v240 = vsel %vm226, %v211, 0
    %v243 = vsel %vm226, %v212, 0
    %v246 = vsel %vm226, %v213, 0
    %v249 = vsel %vm226, %v214, 0
    %v252 = vsel %vm226, %v215, 0
    %v255 = vsel %vm226, %v216, 0
    %v258 = vsel %vm226, %v217, 0
    %v261 = vsel %vm226, %v218, 0
    %v264 = vsel %vm226, %v219, 0
    %v267 = vsel %vm226, %v220, 0
    %v270 = vsel %vm226, %v221, 0
    %v273 = vsel %vm226, %v222, 0
    %275 = vmatprep.subr.mxu0 0.0
    %276 = vmatpush1.msra.mxu0 %v223
    %277 = vmatprep.subr.mxu0 0.0
    %278 = vmatpush1.msra.mxu0 %v224
    %279 = vmatprep.subr.mxu0 0.0
    %280 = vmatpush1.msra.mxu0 %v225
    %281 = vmatprep.subr.mxu0 0.0
    %282 = vmatpush1.msra.mxu0 0.0
    %283 = vmatprep.subr.mxu0 0.0
    %284 = vmatpush1.msra.mxu0 0.0
    %285 = vmatprep.subr.mxu0 0.0
    %286 = vmatpush1.msra.mxu0 0.0
    %287 = vmatprep.subr.mxu0 0.0
    %288 = vmatpush1.msra.mxu0 0.0
    %289 = vmatprep.subr.mxu0 0.0
    %290 = vmatpush1.msra.mxu0 0.0
    %291 = vmatprep.subr.mxu0 0.0
    %292 = vmatpush1.msra.mxu0 0.0
    %293 = vmatprep.subr.mxu0 0.0
    %294 = vmatpush1.msra.mxu0 0.0
    %295 = vmatprep.subr.mxu0 0.0
    %296 = vmatpush1.msra.mxu0 0.0
    %297 = vmatprep.subr.mxu0 0.0
    %298 = vmatpush1.msra.mxu0 0.0
    %299 = vmatprep.subr.mxu0 0.0
    %300 = vmatpush1.msra.mxu0 0.0
    %301 = vmatprep.subr.mxu0 0.0
    %302 = vmatpush1.msra.mxu0 0.0
    %303 = vmatprep.subr.mxu0 0.0
    %304 = vmatpush1.msra.mxu0 0.0
    %305 = vmatprep.subr.mxu0 0.0
    %306 = vmatpush1.msra.mxu0 0.0
    %307 = vmatprep.subr.mxu0 0.0
    %308 = vmatpush1.msra.mxu0 0.0
    %309 = vmatprep.subr.mxu0 0.0
    %310 = vmatpush1.msra.mxu0 0.0
    %311 = vmatprep.subr.mxu0 0.0
    %312 = vmatpush1.msra.mxu0 0.0
    %313 = vmatprep.subr.mxu0 0.0
    %314 = vmatpush1.msra.mxu0 0.0
    %315 = vmatprep.subr.mxu0 0.0
    %316 = vmatpush1.msra.mxu0 0.0
    %317 = vmatprep.subr.mxu0 0.0
    %318 = vmatpush1.msra.mxu0 0.0
    %319 = vmatprep.subr.mxu0 0.0
    %320 = vmatpush1.msra.mxu0 0.0
    %321 = vmatprep.subr.mxu0 0.0
    %322 = vmatpush1.msra.mxu0 0.0
    %323 = vmatprep.subr.mxu0 0.0
    %324 = vmatpush1.msra.mxu0 0.0
    %325 = vmatprep.subr.mxu0 0.0
    %326 = vmatpush1.msra.mxu0 0.0
    %327 = vmatprep.subr.mxu0 0.0
    %328 = vmatpush1.msra.mxu0 0.0
    %329 = vmatprep.subr.mxu0 0.0
    %330 = vmatpush1.msra.mxu0 0.0
    %331 = vmatprep.subr.mxu0 0.0
    %332 = vmatpush1.msra.mxu0 0.0
    %333 = vmatprep.subr.mxu0 0.0
    %334 = vmatpush1.msra.mxu0 0.0
    %335 = vmatprep.subr.mxu0 0.0
    %336 = vmatpush1.msra.mxu0 0.0
    %337 = vmatprep.subr.mxu0 0.0
    %338 = vmatpush1.msra.mxu0 0.0
    %339 = vmatprep.mubr.f32.mxu0 0.0
    %340 = vmatmul.mubr.f32.gmra.mrb[0].mxu0 %v228
    %v341 = vpop.f32.mrb[0].mxu0
    %v342 = vadd.f32 0.0, %v341
    %v343 = vpop.f32.mrb[0].mxu0
    %344 = vmatprep.mubr.f32.mxu0 0.0
    %345 = vmatmul.mubr.f32.gmra.mrb[0].mxu0 %v231
    %v346 = vpop.f32.mrb[0].mxu0
    %v347 = vadd.f32 0.0, %v346
    %v348 = vpop.f32.mrb[0].mxu0
    %349 = vmatprep.mubr.f32.mxu0 0.0
    %350 = vmatmul.mubr.f32.gmra.mrb[0].mxu0 %v234
    %v351 = vpop.f32.mrb[0].mxu0
    %v352 = vadd.f32 0.0, %v351
    %v353 = vpop.f32.mrb[0].mxu0
    %354 = vmatprep.mubr.f32.mxu0 0.0
    %355 = vmatmul.mubr.f32.gmra.mrb[0].mxu0 %v237
    %v356 = vpop.f32.mrb[0].mxu0
    %v357 = vadd.f32 0.0, %v356
    %v358 = vpop.f32.mrb[0].mxu0
    %359 = vmatprep.mubr.f32.mxu0 0.0
    %360 = vmatmul.mubr.f32.gmra.mrb[0].mxu0 %v240
    %v361 = vpop.f32.mrb[0].mxu0
    %v362 = vadd.f32 0.0, %v361
    %v363 = vpop.f32.mrb[0].mxu0
    %364 = vmatprep.mubr.f32.mxu0 0.0
    %365 = vmatmul.mubr.f32.gmra.mrb[0].mxu0 %v243
    %v366 = vpop.f32.mrb[0].mxu0
    %v367 = vadd.f32 0.0, %v366
    %v368 = vpop.f32.mrb[0].mxu0
    %369 = vmatprep.mubr.f32.mxu0 0.0
    %370 = vmatmul.mubr.f32.gmra.mrb[0].mxu0 %v246
    %v371 = vpop.f32.mrb[0].mxu0
    %v372 = vadd.f32 0.0, %v371
    %v373 = vpop.f32.mrb[0].mxu0
    %374 = vmatprep.mubr.f32.mxu0 0.0
    %375 = vmatmul.mubr.f32.gmra.mrb[0].mxu0 %v249
    %v376 = vpop.f32.mrb[0].mxu0
    %v377 = vadd.f32 0.0, %v376
    %v378 = vpop.f32.mrb[0].mxu0
    %379 = vmatprep.mubr.f32.mxu0 0.0
    %380 = vmatmul.mubr.f32.gmra.mrb[0].mxu0 %v252
    %v381 = vpop.f32.mrb[0].mxu0
    %v382 = vadd.f32 0.0, %v381
    %v383 = vpop.f32.mrb[0].mxu0
    %384 = vmatprep.mubr.f32.mxu0 0.0
    %385 = vmatmul.mubr.f32.gmra.mrb[0].mxu0 %v255
    %v386 = vpop.f32.mrb[0].mxu0
    %v387 = vadd.f32 0.0, %v386
    %v388 = vpop.f32.mrb[0].mxu0
    %389 = vmatprep.mubr.f32.mxu0 0.0
    %390 = vmatmul.mubr.f32.gmra.mrb[0].mxu0 %v258
    %v391 = vpop.f32.mrb[0].mxu0
    %v392 = vadd.f32 0.0, %v391
    %v393 = vpop.f32.mrb[0].mxu0
    %394 = vmatprep.mubr.f32.mxu0 0.0
    %395 = vmatmul.mubr.f32.gmra.mrb[0].mxu0 %v261
    %v396 = vpop.f32.mrb[0].mxu0
    %v397 = vadd.f32 0.0, %v396
    %v398 = vpop.f32.mrb[0].mxu0
    %399 = vmatprep.mubr.f32.mxu0 0.0
    %400 = vmatmul.mubr.f32.gmra.mrb[0].mxu0 %v264
    %v401 = vpop.f32.mrb[0].mxu0
    %v402 = vadd.f32 0.0, %v401
    %v403 = vpop.f32.mrb[0].mxu0
    %404 = vmatprep.mubr.f32.mxu0 0.0
    %405 = vmatmul.mubr.f32.gmra.mrb[0].mxu0 %v267
    %v406 = vpop.f32.mrb[0].mxu0
    %v407 = vadd.f32 0.0, %v406
    %v408 = vpop.f32.mrb[0].mxu0
    %409 = vmatprep.mubr.f32.mxu0 0.0
    %410 = vmatmul.mubr.f32.gmra.mrb[0].mxu0 %v270
    %v411 = vpop.f32.mrb[0].mxu0
    %v412 = vadd.f32 0.0, %v411
    %v413 = vpop.f32.mrb[0].mxu0
    %414 = vmatprep.mubr.f32.mxu0 0.0
    %415 = vmatmul.mubr.f32.gmra.mrb[0].mxu0 %v273
    %v416 = vpop.f32.mrb[0].mxu0
    %v417 = vadd.f32 0.0, %v416
    %v418 = vpop.f32.mrb[0].mxu0
    %419 = vdwg.mxu0
    %v420 = vld [vmem:[%s3] sm:$0xff]
    %v421 = vld [vmem:[%s3 + $0x8] sm:$0xff]
    %v422 = vld [vmem:[%s3 + $0x10] sm:$0xff]
    %v423 = vld [vmem:[%s3 + $0x18] sm:$0xff]
    %v424 = vld [vmem:[%s3 + $0x20] sm:$0xff]
    %v425 = vld [vmem:[%s3 + $0x28] sm:$0xff]
    %v426 = vld [vmem:[%s3 + $0x30] sm:$0xff]
    %v427 = vld [vmem:[%s3 + $0x38] sm:$0xff]
    %v428 = vld [vmem:[%s4] sm:$0x1]
    %v430 = vlaneseq
    %v431 = vshrl.u32 %v430, 7
    %v432 = vsub.s32 0, %v431
    %v433 = vrot.slane %v428, %v432
    %vm435 = vcmask 523264
    %v437 = vsel %vm435, %v342, 0
    %v440 = vsel %vm435, %v347, 0
    %v443 = vsel %vm435, %v352, 0
    %v446 = vsel %vm435, %v357, 0
    %v449 = vsel %vm435, %v362, 0
    %v452 = vsel %vm435, %v367, 0
    %v455 = vsel %vm435, %v372, 0
    %v458 = vsel %vm435, %v377, 0
    %v461 = vsel %vm435, %v382, 0
    %v464 = vsel %vm435, %v387, 0
    %v467 = vsel %vm435, %v392, 0
    %v470 = vsel %vm435, %v397, 0
    %v473 = vsel %vm435, %v402, 0
    %v476 = vsel %vm435, %v407, 0
    %v479 = vsel %vm435, %v412, 0
    %v482 = vsel %vm435, %v417, 0
    %484 = vmatprep.subr.mxu0 0.0
    %485 = vmatpush1.msra.mxu0 %v420
    %486 = vmatprep.subr.mxu0 0.0
    %487 = vmatpush1.msra.mxu0 %v421
    %488 = vmatprep.subr.mxu0 0.0
    %489 = vmatpush1.msra.mxu0 %v422
    %490 = vmatprep.subr.mxu0 0.0
    %491 = vmatpush1.msra.mxu0 %v423
    %492 = vmatprep.subr.mxu0 0.0
    %493 = vmatpush1.msra.mxu0 %v424
    %494 = vmatprep.subr.mxu0 0.0
    %495 = vmatpush1.msra.mxu0 %v425
    %496 = vmatprep.subr.mxu0 0.0
    %497 = vmatpush1.msra.mxu0 %v426
    %498 = vmatprep.subr.mxu0 0.0
    %499 = vmatpush1.msra.mxu0 %v427
    %500 = vmatprep.subr.mxu0 0.0
    %501 = vmatpush1.msra.mxu0 0.0
    %502 = vmatprep.subr.mxu0 0.0
    %503 = vmatpush1.msra.mxu0 0.0
    %504 = vmatprep.subr.mxu0 0.0
    %505 = vmatpush1.msra.mxu0 0.0
    %506 = vmatprep.subr.mxu0 0.0
    %507 = vmatpush1.msra.mxu0 0.0
    %508 = vmatprep.subr.mxu0 0.0
    %509 = vmatpush1.msra.mxu0 0.0
    %510 = vmatprep.subr.mxu0 0.0
    %511 = vmatpush1.msra.mxu0 0.0
    %512 = vmatprep.subr.mxu0 0.0
    %513 = vmatpush1.msra.mxu0 0.0
    %514 = vmatprep.subr.mxu0 0.0
    %515 = vmatpush1.msra.mxu0 0.0
    %516 = vmatprep.subr.mxu0 0.0
    %517 = vmatpush1.msra.mxu0 0.0
    %518 = vmatprep.subr.mxu0 0.0
    %519 = vmatpush1.msra.mxu0 0.0
    %520 = vmatprep.subr.mxu0 0.0
    %521 = vmatpush1.msra.mxu0 0.0
    %522 = vmatprep.subr.mxu0 0.0
    %523 = vmatpush1.msra.mxu0 0.0
    %524 = vmatprep.subr.mxu0 0.0
    %525 = vmatpush1.msra.mxu0 0.0
    %526 = vmatprep.subr.mxu0 0.0
    %527 = vmatpush1.msra.mxu0 0.0
    %528 = vmatprep.subr.mxu0 0.0
    %529 = vmatpush1.msra.mxu0 0.0
    %530 = vmatprep.subr.mxu0 0.0
    %531 = vmatpush1.msra.mxu0 0.0
    %532 = vmatprep.subr.mxu0 0.0
    %533 = vmatpush1.msra.mxu0 0.0
    %534 = vmatprep.subr.mxu0 0.0
    %535 = vmatpush1.msra.mxu0 0.0
    %536 = vmatprep.subr.mxu0 0.0
    %537 = vmatpush1.msra.mxu0 0.0
    %538 = vmatprep.subr.mxu0 0.0
    %539 = vmatpush1.msra.mxu0 0.0
    %540 = vmatprep.subr.mxu0 0.0
    %541 = vmatpush1.msra.mxu0 0.0
    %542 = vmatprep.subr.mxu0 0.0
    %543 = vmatpush1.msra.mxu0 0.0
    %544 = vmatprep.subr.mxu0 0.0
    %545 = vmatpush1.msra.mxu0 0.0
    %546 = vmatprep.subr.mxu0 0.0
    %547 = vmatpush1.msra.mxu0 0.0
    %548 = vmatprep.mubr.f32.mxu0 0.0
    %549 = vmatmul.mubr.f32.gmra.mrb[0].mxu0 %v437
    %v550 = vpop.f32.mrb[0].mxu0
    %v551 = vadd.f32 %v433, %v550
    %v552 = vpop.f32.mrb[0].mxu0
    %553 = vmatprep.mubr.f32.mxu0 0.0
    %554 = vmatmul.mubr.f32.gmra.mrb[0].mxu0 %v440
    %v555 = vpop.f32.mrb[0].mxu0
    %v556 = vadd.f32 %v433, %v555
    %v557 = vpop.f32.mrb[0].mxu0
    %558 = vmatprep.mubr.f32.mxu0 0.0
    %559 = vmatmul.mubr.f32.gmra.mrb[0].mxu0 %v443
    %v560 = vpop.f32.mrb[0].mxu0
    %v561 = vadd.f32 %v433, %v560
    %v562 = vpop.f32.mrb[0].mxu0
    %563 = vmatprep.mubr.f32.mxu0 0.0
    %564 = vmatmul.mubr.f32.gmra.mrb[0].mxu0 %v446
    %v565 = vpop.f32.mrb[0].mxu0
    %v566 = vadd.f32 %v433, %v565
    %v567 = vpop.f32.mrb[0].mxu0
    %568 = vmatprep.mubr.f32.mxu0 0.0
    %569 = vmatmul.mubr.f32.gmra.mrb[0].mxu0 %v449
    %v570 = vpop.f32.mrb[0].mxu0
    %v571 = vadd.f32 %v433, %v570
    %v572 = vpop.f32.mrb[0].mxu0
    %573 = vmatprep.mubr.f32.mxu0 0.0
    %574 = vmatmul.mubr.f32.gmra.mrb[0].mxu0 %v452
    %v575 = vpop.f32.mrb[0].mxu0
    %v576 = vadd.f32 %v433, %v575
    %v577 = vpop.f32.mrb[0].mxu0
    %578 = vmatprep.mubr.f32.mxu0 0.0
    %579 = vmatmul.mubr.f32.gmra.mrb[0].mxu0 %v455
    %v580 = vpop.f32.mrb[0].mxu0
    %v581 = vadd.f32 %v433, %v580
    %v582 = vpop.f32.mrb[0].mxu0
    %583 = vmatprep.mubr.f32.mxu0 0.0
    %584 = vmatmul.mubr.f32.gmra.mrb[0].mxu0 %v458
    %v585 = vpop.f32.mrb[0].mxu0
    %v586 = vadd.f32 %v433, %v585
    %v587 = vpop.f32.mrb[0].mxu0
    %588 = vmatprep.mubr.f32.mxu0 0.0
    %589 = vmatmul.mubr.f32.gmra.mrb[0].mxu0 %v461
    %v590 = vpop.f32.mrb[0].mxu0
    %v591 = vadd.f32 %v433, %v590
    %v592 = vpop.f32.mrb[0].mxu0
    %593 = vmatprep.mubr.f32.mxu0 0.0
    %594 = vmatmul.mubr.f32.gmra.mrb[0].mxu0 %v464
    %v595 = vpop.f32.mrb[0].mxu0
    %v596 = vadd.f32 %v433, %v595
    %v597 = vpop.f32.mrb[0].mxu0
    %598 = vmatprep.mubr.f32.mxu0 0.0
    %599 = vmatmul.mubr.f32.gmra.mrb[0].mxu0 %v467
    %v600 = vpop.f32.mrb[0].mxu0
    %v601 = vadd.f32 %v433, %v600
    %v602 = vpop.f32.mrb[0].mxu0
    %603 = vmatprep.mubr.f32.mxu0 0.0
    %604 = vmatmul.mubr.f32.gmra.mrb[0].mxu0 %v470
    %v605 = vpop.f32.mrb[0].mxu0
    %v606 = vadd.f32 %v433, %v605
    %v607 = vpop.f32.mrb[0].mxu0
    %608 = vmatprep.mubr.f32.mxu0 0.0
    %609 = vmatmul.mubr.f32.gmra.mrb[0].mxu0 %v473
    %v610 = vpop.f32.mrb[0].mxu0
    %v611 = vadd.f32 %v433, %v610
    %v612 = vpop.f32.mrb[0].mxu0
    %613 = vmatprep.mubr.f32.mxu0 0.0
    %614 = vmatmul.mubr.f32.gmra.mrb[0].mxu0 %v476
    %v615 = vpop.f32.mrb[0].mxu0
    %v616 = vadd.f32 %v433, %v615
    %v617 = vpop.f32.mrb[0].mxu0
    %618 = vmatprep.mubr.f32.mxu0 0.0
    %619 = vmatmul.mubr.f32.gmra.mrb[0].mxu0 %v479
    %v620 = vpop.f32.mrb[0].mxu0
    %v621 = vadd.f32 %v433, %v620
    %v622 = vpop.f32.mrb[0].mxu0
    %623 = vmatprep.mubr.f32.mxu0 0.0
    %624 = vmatmul.mubr.f32.gmra.mrb[0].mxu0 %v482
    %v625 = vpop.f32.mrb[0].mxu0
    %v626 = vadd.f32 %v433, %v625
    %v627 = vpop.f32.mrb[0].mxu0
    %628 = vdwg.mxu0
    %v629 = vmax.f32 %v551, 0.0
    %v630 = vmax.f32 %v556, 0.0
    %v631 = vmax.f32 %v561, 0.0
    %v632 = vmax.f32 %v566, 0.0
    %v633 = vmax.f32 %v571, 0.0
    %v634 = vmax.f32 %v576, 0.0
    %v635 = vmax.f32 %v581, 0.0
    %v636 = vmax.f32 %v586, 0.0
    %v637 = vmax.f32 %v591, 0.0
    %v638 = vmax.f32 %v596, 0.0
    %v639 = vmax.f32 %v601, 0.0
    %v640 = vmax.f32 %v606, 0.0
    %v641 = vmax.f32 %v611, 0.0
    %v642 = vmax.f32 %v616, 0.0
    %v643 = vmax.f32 %v621, 0.0
    %v644 = vmax.f32 %v626, 0.0
    %v645 = vld [vmem:[%s5] sm:$0x1]
    %v646 = vld [vmem:[#allocation2] sm:$0x1]
    %648 = vset.pattern.permute.xlu0 0
    %649 = vperm.xlu0 %648, %v646
    %v650 = vpop.permute.xlu0 %649
    %v652 = vlaneseq
    %v653 = vshrl.u32 %v652, 7
    %v654 = vsub.s32 0, %v653
    %v655 = vrot.slane %v650, %v654
    %vm656 = vcmask 261120
    %v658 = vsel %vm656, %v645, 0
    %v661 = vsel %vm656, %v629, 0
    %v664 = vsel %vm656, %v630, 0
    %v667 = vsel %vm656, %v631, 0
    %v670 = vsel %vm656, %v632, 0
    %v673 = vsel %vm656, %v633, 0
    %v676 = vsel %vm656, %v634, 0
    %v679 = vsel %vm656, %v635, 0
    %v682 = vsel %vm656, %v636, 0
    %v685 = vsel %vm656, %v637, 0
    %v688 = vsel %vm656, %v638, 0
    %v691 = vsel %vm656, %v639, 0
    %v694 = vsel %vm656, %v640, 0
    %v697 = vsel %vm656, %v641, 0
    %v700 = vsel %vm656, %v642, 0
    %v703 = vsel %vm656, %v643, 0
    %v706 = vsel %vm656, %v644, 0
    %708 = vmatprep.subr.mxu0 0.0
    %709 = vmatpush1.xpose.msra.mxu0 %v661
    %710 = vmatprep.subr.mxu0 0.0
    %711 = vmatpush1.xpose.msra.mxu0 %v664
    %712 = vmatprep.subr.mxu0 0.0
    %713 = vmatpush1.xpose.msra.mxu0 %v667
    %714 = vmatprep.subr.mxu0 0.0
    %715 = vmatpush1.xpose.msra.mxu0 %v670
    %716 = vmatprep.subr.mxu0 0.0
    %717 = vmatpush1.xpose.msra.mxu0 %v673
    %718 = vmatprep.subr.mxu0 0.0
    %719 = vmatpush1.xpose.msra.mxu0 %v676
    %720 = vmatprep.subr.mxu0 0.0
    %721 = vmatpush1.xpose.msra.mxu0 %v679
    %722 = vmatprep.subr.mxu0 0.0
    %723 = vmatpush1.xpose.msra.mxu0 %v682
    %724 = vmatprep.subr.mxu0 0.0
    %725 = vmatpush1.xpose.msra.mxu0 %v685
    %726 = vmatprep.subr.mxu0 0.0
    %727 = vmatpush1.xpose.msra.mxu0 %v688
    %728 = vmatprep.subr.mxu0 0.0
    %729 = vmatpush1.xpose.msra.mxu0 %v691
    %730 = vmatprep.subr.mxu0 0.0
    %731 = vmatpush1.xpose.msra.mxu0 %v694
    %732 = vmatprep.subr.mxu0 0.0
    %733 = vmatpush1.xpose.msra.mxu0 %v697
    %734 = vmatprep.subr.mxu0 0.0
    %735 = vmatpush1.xpose.msra.mxu0 %v700
    %736 = vmatprep.subr.mxu0 0.0
    %737 = vmatpush1.xpose.msra.mxu0 %v703
    %738 = vmatprep.subr.mxu0 0.0
    %739 = vmatpush1.xpose.msra.mxu0 %v706
    %740 = vmatprep.subr.mxu0 0.0
    %741 = vmatpush1.xpose.msra.mxu0 0.0
    %742 = vmatprep.subr.mxu0 0.0
    %743 = vmatpush1.xpose.msra.mxu0 0.0
    %744 = vmatprep.subr.mxu0 0.0
    %745 = vmatpush1.xpose.msra.mxu0 0.0
    %746 = vmatprep.subr.mxu0 0.0
    %747 = vmatpush1.xpose.msra.mxu0 0.0
    %748 = vmatprep.subr.mxu0 0.0
    %749 = vmatpush1.xpose.msra.mxu0 0.0
    %750 = vmatprep.subr.mxu0 0.0
    %751 = vmatpush1.xpose.msra.mxu0 0.0
    %752 = vmatprep.subr.mxu0 0.0
    %753 = vmatpush1.xpose.msra.mxu0 0.0
    %754 = vmatprep.subr.mxu0 0.0
    %755 = vmatpush1.xpose.msra.mxu0 0.0
    %756 = vmatprep.subr.mxu0 0.0
    %757 = vmatpush1.xpose.msra.mxu0 0.0
    %758 = vmatprep.subr.mxu0 0.0
    %759 = vmatpush1.xpose.msra.mxu0 0.0
    %760 = vmatprep.subr.mxu0 0.0
    %761 = vmatpush1.xpose.msra.mxu0 0.0
    %762 = vmatprep.subr.mxu0 0.0
    %763 = vmatpush1.xpose.msra.mxu0 0.0
    %764 = vmatprep.subr.mxu0 0.0
    %765 = vmatpush1.xpose.msra.mxu0 0.0
    %766 = vmatprep.subr.mxu0 0.0
    %767 = vmatpush1.xpose.msra.mxu0 0.0
    %768 = vmatprep.subr.mxu0 0.0
    %769 = vmatpush1.xpose.msra.mxu0 0.0
    %770 = vmatprep.subr.mxu0 0.0
    %771 = vmatpush1.xpose.msra.mxu0 0.0
    %772 = vmatprep.mubr.f32.mxu0 0.0
    %773 = vmatmul.mubr.f32.gmra.mrb[0].mxu0 %v658
    %v774 = vpop.f32.mrb[0].mxu0
    %v775 = vadd.f32 %v655, %v774
    %v776 = vpop.f32.mrb[0].mxu0
    %777 = vdwg.mxu0
    %778 = vst [vmem:[#allocation3] sm:$0x1] %v775
    // Predicated region
    $region30: #{tpu_custom_call.1} parent=1 // pred_check
      _
    $region31: #{tpu_custom_call.1} parent=1 // pred_check_branch
      %780 = sbr.rel (0) target = $region33
    $region32: #{tpu_custom_call.1} parent=1 // pred_region
      %s782 = ssub.s32 16, 16
      %783 = vsyncadd [#allocation4], %s782
      %s785 = sshll.u32 [#allocation3], 4
      %s786 = int_to_ptr.vmem [resolvable:$true] %s785
      %788 = dma.vmem_to_hbm [thread:$0]  %s786, 16, %s7, [#allocation4]
    $region33: #{tpu_custom_call.1} parent=1 // pred_fallthru
      _
    // Predicated region
    $region34: #{tpu_custom_call.1} parent=1 // pred_check
      _
    $region35: #{tpu_custom_call.1} parent=1 // pred_check_branch
      %790 = sbr.rel (0) target = $region37
    $region36: #{tpu_custom_call.1} parent=1 // pred_region
      %791 = dma.done [#allocation4], 16
    $region37: #{tpu_custom_call.1} parent=1 // pred_fallthru
      _
    %792 = vsyncpa [#allocation4], 1

</llo_original>
